<compile_context>
chip_gen: v7x
topology: tpu7x:2x2x1
jax: 0.10.0
libtpu: 0.0.40
codegen_flags: <defaults>
</compile_context>

<pallas_src>
import functools

import jax
import jax.numpy as jnp
from jax.experimental import pallas as pl
from jax.experimental.pallas import tpu as pltpu


def _round_up(x, m):
    return ((x + m - 1) // m) * m


def _proj_ln_kernel(p_ref, w_ref, b_ref, g_ref, beta_ref, o_ref):
    # p_ref:    (1, tm, K)     bf16 im2col patches for this tile
    # w_ref:    (K, Cout)      bf16 folded conv weight
    # b_ref:    (1, Cout)      f32  conv bias
    # g_ref:    (1, Cout)      f32  LayerNorm gamma
    # beta_ref: (1, Cout)      f32  LayerNorm beta
    # o_ref:    (1, tm, Cout)  f32
    acc = jnp.dot(p_ref[0], w_ref[...], preferred_element_type=jnp.float32)
    y = acc + b_ref[...]                       # conv bias
    mu = jnp.mean(y, axis=-1, keepdims=True)   # LayerNorm over embed dim
    d = y - mu
    var = jnp.mean(d * d, axis=-1, keepdims=True)
    inv = jax.lax.rsqrt(var + 1e-5)
    o_ref[0] = (d * inv * g_ref[...] + beta_ref[...]).astype(o_ref.dtype)


def overlap_patch_embed(x_nchw, params, *, patch_size=7, stride=4):
    """Forward pass of OverlapPatchEmbed. Input/output are NCHW float32."""
    w = params["proj_w"]      # (Cout, Cin, k, k)   PyTorch OIHW layout
    b = params["proj_b"]      # (Cout,)
    gamma = params["ln_g"]    # (Cout,)
    beta = params["ln_b"]     # (Cout,)

    N, Cin, H, W = x_nchw.shape
    Cout = w.shape[0]
    k = patch_size
    pad = k // 2
    Ho = (H + 2 * pad - k) // stride + 1
    Wo = (W + 2 * pad - k) // stride + 1
    K = k * k * Cin

    # NCHW -> NHWC, conv zero-padding, im2col (tap-major, Cin-minor) in bf16.
    x = jnp.transpose(x_nchw, (0, 2, 3, 1))
    xp = jnp.pad(x, ((0, 0), (pad, pad), (pad, pad), (0, 0)))
    taps = []
    for ky in range(k):
        for kx in range(k):
            taps.append(
                xp[:, ky:ky + stride * (Ho - 1) + 1:stride,
                      kx:kx + stride * (Wo - 1) + 1:stride, :])
    patches = jnp.concatenate(taps, axis=-1)              # (N, Ho, Wo, K)
    M = Ho * Wo
    patches = patches.reshape(N, M, K).astype(jnp.bfloat16)

    # Tile the patch axis: bounded accumulator + grid parallelism.
    tm = 128 if M >= 128 else M
    Mp = _round_up(M, tm)
    if Mp != M:
        patches = jnp.pad(patches, ((0, 0), (0, Mp - M), (0, 0)))

    # Conv weight (Cout, Cin, k, k) -> (k*k*Cin, Cout), matching the im2col order.
    w2 = jnp.transpose(w, (2, 3, 1, 0)).reshape(K, Cout).astype(jnp.bfloat16)
    b2 = b.reshape(1, Cout).astype(jnp.float32)
    g2 = gamma.reshape(1, Cout).astype(jnp.float32)
    be2 = beta.reshape(1, Cout).astype(jnp.float32)

    # VMEM budget: double-buffered patch tile + weight + output tile (+ params).
    vmem_bytes = 2 * (tm * K * 2 + K * Cout * 2 + tm * Cout * 4) + 6 * Cout * 4
    vmem_limit = int(min(max(4 * vmem_bytes, 16 * 1024 * 1024), 48 * 1024 * 1024))

    out = pl.pallas_call(
        _proj_ln_kernel,
        out_shape=jax.ShapeDtypeStruct((N, Mp, Cout), jnp.float32),
        grid_spec=pltpu.PrefetchScalarGridSpec(
            num_scalar_prefetch=0,
            grid=(N, Mp // tm),
            in_specs=[
                pl.BlockSpec((1, tm, K), lambda n, m: (n, m, 0)),
                pl.BlockSpec((K, Cout), lambda n, m: (0, 0)),
                pl.BlockSpec((1, Cout), lambda n, m: (0, 0)),
                pl.BlockSpec((1, Cout), lambda n, m: (0, 0)),
                pl.BlockSpec((1, Cout), lambda n, m: (0, 0)),
            ],
            out_specs=pl.BlockSpec((1, tm, Cout), lambda n, m: (n, m, 0)),
        ),
        compiler_params=pltpu.CompilerParams(
            dimension_semantics=("parallel", "parallel"),
            vmem_limit_bytes=vmem_limit,
        ),
    )(patches, w2, b2, g2, be2)

    out = out[:, :M, :].reshape(N, Ho, Wo, Cout)
    return jnp.transpose(out, (0, 3, 1, 2))   # NHWC -> NCHW


def make_overlap_patch_embed_params(key, in_chans=3, embed_dim=32, patch_size=7):
    # Conv weight init matches the module (normal with std sqrt(2/fan_out)).
    # Conv bias / LN affine are given small random values (PyTorch inits them to
    # 0 / 1,0) purely to exercise the fused bias + affine math in the kernel.
    k1, k2, k3, k4 = jax.random.split(key, 4)
    fan_out = patch_size * patch_size * embed_dim
    w = jax.random.normal(k1, (embed_dim, in_chans, patch_size, patch_size),
                          jnp.float32) * (2.0 / fan_out) ** 0.5
    b = 0.05 * jax.random.normal(k2, (embed_dim,), jnp.float32)
    gamma = 1.0 + 0.1 * jax.random.normal(k3, (embed_dim,), jnp.float32)
    beta = 0.1 * jax.random.normal(k4, (embed_dim,), jnp.float32)
    return {"proj_w": w, "proj_b": b, "ln_g": gamma, "ln_b": beta}


def _reference(x_nchw, params, *, patch_size=7, stride=4):
    """Pure-JAX (f32) reference: Conv2d + bias, then LayerNorm over channels."""
    w, b = params["proj_w"], params["proj_b"]
    gamma, beta = params["ln_g"], params["ln_b"]
    pad = patch_size // 2
    y = jax.lax.conv_general_dilated(
        x_nchw, w, window_strides=(stride, stride),
        padding=((pad, pad), (pad, pad)),
        dimension_numbers=("NCHW", "OIHW", "NCHW"))
    y = y + b[None, :, None, None]
    yt = jnp.transpose(y, (0, 2, 3, 1))
    mu = jnp.mean(yt, axis=-1, keepdims=True)
    var = jnp.mean((yt - mu) ** 2, axis=-1, keepdims=True)
    yt = (yt - mu) / jnp.sqrt(var + 1e-5) * gamma + beta
    return jnp.transpose(yt, (0, 3, 1, 2))


if __name__ == "__main__":
    key = jax.random.PRNGKey(0)
    k_x, k_p = jax.random.split(key)

    N, Cin, H, W = 2, 3, 16, 16
    embed_dim, patch_size, stride = 32, 7, 4

    x = jax.random.normal(k_x, (N, Cin, H, W), jnp.float32)
    params = make_overlap_patch_embed_params(
        k_p, in_chans=Cin, embed_dim=embed_dim, patch_size=patch_size)

    fwd = jax.jit(functools.partial(overlap_patch_embed,
                                    patch_size=patch_size, stride=stride))
    y = jax.block_until_ready(fwd(x, params))

    Ho = (H + 2 * (patch_size // 2) - patch_size) // stride + 1
    Wo = (W + 2 * (patch_size // 2) - patch_size) // stride + 1
    assert y.shape == (N, embed_dim, Ho, Wo)
    assert bool(jnp.all(jnp.isfinite(y)))

    y_ref = _reference(x, params, patch_size=patch_size, stride=stride)
    max_err = float(jnp.max(jnp.abs(y - y_ref)))
    assert bool(jnp.allclose(y, y_ref, atol=5e-2, rtol=5e-2)), max_err
    print("KERNEL_OK")
</pallas_src>

<mosaic_0001>
module attributes {stable_mosaic.version = 11 : i64} {
  func.func @_proj_ln_kernel(%arg0: i32, %arg1: i32, %arg2: memref<1x16x147xbf16, #tpu.memory_space<vmem>>, %arg3: memref<147x32xbf16, #tpu.memory_space<vmem>>, %arg4: memref<1x32xf32, #tpu.memory_space<vmem>>, %arg5: memref<1x32xf32, #tpu.memory_space<vmem>>, %arg6: memref<1x32xf32, #tpu.memory_space<vmem>>, %arg7: memref<1x16x32xf32, #tpu.memory_space<vmem>>) attributes {dimension_semantics = [#tpu.dimension_semantics<parallel>, #tpu.dimension_semantics<parallel>], iteration_bounds = array<i64: 2, 1>, scalar_prefetch = 0 : i64, scratch_operands = 0 : i64, tpu.core_type = #tpu.core_type<tc>, window_params = [{transform_indices = @transform_0, window_bounds = array<i64: 1, 16, 147>}, {pipeline_mode = #tpu.pipeline_mode<synchronous>, transform_indices = @transform_1, window_bounds = array<i64: 147, 32>}, {pipeline_mode = #tpu.pipeline_mode<synchronous>, transform_indices = @transform_2, window_bounds = array<i64: 1, 32>}, {pipeline_mode = #tpu.pipeline_mode<synchronous>, transform_indices = @transform_3, window_bounds = array<i64: 1, 32>}, {pipeline_mode = #tpu.pipeline_mode<synchronous>, transform_indices = @transform_4, window_bounds = array<i64: 1, 32>}, {transform_indices = @transform_5, window_bounds = array<i64: 1, 16, 32>}]} {
    %c0 = arith.constant 0 : index
    %c0_0 = arith.constant 0 : index
    %c0_1 = arith.constant 0 : index
    %0 = vector.load %arg2[%c0, %c0_0, %c0_1] : memref<1x16x147xbf16, #tpu.memory_space<vmem>>, vector<1x16x147xbf16>
    %1 = vector.shape_cast %0 : vector<1x16x147xbf16> to vector<16x147xbf16>
    %c0_2 = arith.constant 0 : index
    %c0_3 = arith.constant 0 : index
    %2 = vector.load %arg3[%c0_2, %c0_3] : memref<147x32xbf16, #tpu.memory_space<vmem>>, vector<147x32xbf16>
    %cst = arith.constant dense<0.000000e+00> : vector<16x32xf32>
    %3 = tpu.matmul %1, %2, %cst {dimension_numbers = #tpu.dot_dimension_numbers<[1], [0], [0], [1], [0, 0, 1, 1], [], []>} : vector<16x147xbf16>, vector<147x32xbf16>, vector<16x32xf32> -> vector<16x32xf32>
    %c0_4 = arith.constant 0 : index
    %c0_5 = arith.constant 0 : index
    %4 = vector.load %arg4[%c0_4, %c0_5] : memref<1x32xf32, #tpu.memory_space<vmem>>, vector<1x32xf32>
    %5 = vector.broadcast %4 : vector<1x32xf32> to vector<16x32xf32>
    %6 = arith.addf %3, %5 : vector<16x32xf32>
    %cst_6 = arith.constant dense<0.000000e+00> : vector<16xf32>
    %7 = vector.multi_reduction <add>, %6, %cst_6 [1] : vector<16x32xf32> to vector<16xf32>
    %8 = vector.shape_cast %7 : vector<16xf32> to vector<16x1xf32>
    %cst_7 = arith.constant 3.200000e+01 : f32
    %9 = vector.broadcast %cst_7 : f32 to vector<16x1xf32>
    %10 = arith.divf %8, %9 : vector<16x1xf32>
    %11 = vector.broadcast %10 : vector<16x1xf32> to vector<16x32xf32>
    %12 = arith.subf %6, %11 : vector<16x32xf32>
    %13 = arith.mulf %12, %12 : vector<16x32xf32>
    %cst_8 = arith.constant dense<0.000000e+00> : vector<16xf32>
    %14 = vector.multi_reduction <add>, %13, %cst_8 [1] : vector<16x32xf32> to vector<16xf32>
    %15 = vector.shape_cast %14 : vector<16xf32> to vector<16x1xf32>
    %cst_9 = arith.constant 3.200000e+01 : f32
    %16 = vector.broadcast %cst_9 : f32 to vector<16x1xf32>
    %17 = arith.divf %15, %16 : vector<16x1xf32>
    %cst_10 = arith.constant 9.99999974E-6 : f32
    %18 = vector.broadcast %cst_10 : f32 to vector<16x1xf32>
    %19 = arith.addf %17, %18 : vector<16x1xf32>
    %20 = math.rsqrt %19 : vector<16x1xf32>
    %21 = vector.broadcast %20 : vector<16x1xf32> to vector<16x32xf32>
    %22 = arith.mulf %12, %21 : vector<16x32xf32>
    %c0_11 = arith.constant 0 : index
    %c0_12 = arith.constant 0 : index
    %23 = vector.load %arg5[%c0_11, %c0_12] : memref<1x32xf32, #tpu.memory_space<vmem>>, vector<1x32xf32>
    %24 = vector.broadcast %23 : vector<1x32xf32> to vector<16x32xf32>
    %25 = arith.mulf %22, %24 : vector<16x32xf32>
    %c0_13 = arith.constant 0 : index
    %c0_14 = arith.constant 0 : index
    %26 = vector.load %arg6[%c0_13, %c0_14] : memref<1x32xf32, #tpu.memory_space<vmem>>, vector<1x32xf32>
    %27 = vector.broadcast %26 : vector<1x32xf32> to vector<16x32xf32>
    %28 = arith.addf %25, %27 : vector<16x32xf32>
    %c0_15 = arith.constant 0 : index
    %c0_16 = arith.constant 0 : index
    %c0_17 = arith.constant 0 : index
    %29 = vector.load %arg7[%c0_15, %c0_16, %c0_17] : memref<1x16x32xf32, #tpu.memory_space<vmem>>, vector<1x16x32xf32>
    %30 = vector.shape_cast %29 : vector<1x16x32xf32> to vector<16x32xf32>
    %31 = vector.shape_cast %28 : vector<16x32xf32> to vector<1x16x32xf32>
    tpu.vector_store %arg7[%c0_15, %c0_16, %c0_17], %31 {strides = array<i32>} : memref<1x16x32xf32, #tpu.memory_space<vmem>>, vector<1x16x32xf32>,
    return
  }
  func.func @transform_0(%arg0: i32, %arg1: i32) -> (i32, i32, i32) {
    %c0_i32 = arith.constant 0 : i32
    %c0_i32_0 = arith.constant 0 : i32
    return %arg0, %arg1, %c0_i32 : i32, i32, i32
  }
  func.func @transform_1(%arg0: i32, %arg1: i32) -> (i32, i32) {
    %c0_i32 = arith.constant 0 : i32
    %c0_i32_0 = arith.constant 0 : i32
    %c0_i32_1 = arith.constant 0 : i32
    return %c0_i32, %c0_i32_0 : i32, i32
  }
  func.func @transform_2(%arg0: i32, %arg1: i32) -> (i32, i32) {
    %c0_i32 = arith.constant 0 : i32
    %c0_i32_0 = arith.constant 0 : i32
    %c0_i32_1 = arith.constant 0 : i32
    return %c0_i32, %c0_i32_0 : i32, i32
  }
  func.func @transform_3(%arg0: i32, %arg1: i32) -> (i32, i32) {
    %c0_i32 = arith.constant 0 : i32
    %c0_i32_0 = arith.constant 0 : i32
    %c0_i32_1 = arith.constant 0 : i32
    return %c0_i32, %c0_i32_0 : i32, i32
  }
  func.func @transform_4(%arg0: i32, %arg1: i32) -> (i32, i32) {
    %c0_i32 = arith.constant 0 : i32
    %c0_i32_0 = arith.constant 0 : i32
    %c0_i32_1 = arith.constant 0 : i32
    return %c0_i32, %c0_i32_0 : i32, i32
  }
  func.func @transform_5(%arg0: i32, %arg1: i32) -> (i32, i32, i32) {
    %c0_i32 = arith.constant 0 : i32
    %c0_i32_0 = arith.constant 0 : i32
    return %arg0, %arg1, %c0_i32 : i32, i32, i32
  }
}

</mosaic_0001>

<llo_original>
// kernel: overlap_patch_embed.1
$region0: #{overlap_patch_embed.1}
  #allocation0 [shape = 'u32[]', space=smem, size = 0x4, offset = 0x4, fixed_abs, tag = 'smem constant byte address 0x4 - core index']
  #allocation1 [shape = 'u32[144,128]{1,0:T(1,128)}', space=vmem, size = 0x12000, scoped, tag = 'internal scratch']
  %s0 = inlined_call_operand.vmem [shape: bf16[2,16,147], index: 0, kind: input, shape index: {}]
  %s1 = inlined_call_operand.vmem [shape: bf16[147,32], index: 1, kind: input, shape index: {}]
  %s2 = inlined_call_operand.vmem [shape: f32[1,32], index: 2, kind: input, shape index: {}]
  %s3 = inlined_call_operand.vmem [shape: f32[1,32], index: 3, kind: input, shape index: {}]
  %s4 = inlined_call_operand.vmem [shape: f32[1,32], index: 4, kind: input, shape index: {}]
  %s5 = inlined_call_operand.hbm [shape: f32[2,16,32], index: 5, kind: output, shape index: {}]
  %s6 = sld [smem:[#allocation0]]
  $region53: #{overlap_patch_embed.1} parent=0
    _
  %s8 = ssub.s32 1, %s6
  %s9 = scalar_select 0, %s8, %s6
  $region1: #{overlap_patch_embed.1} parent=0
    #allocation2 [shape = 'u8[16384]{0}', space=vmem, size = 0x4000, scoped, tag = 'output window, operand 0']
    #allocation3 [shape = 's32[2]{0}', space=sflag, size = 0x8, scoped, tag = 'scoped memory for overlap_patch_embed.1']
    %10 = vsyncpa [#allocation3], 0
    %s11 = scalar_lea.sflag [#allocation3], 1
    %12 = vsyncpa %s11, 0
    loop: start=0, step=1, limit=4
    $region2: #{overlap_patch_embed.1} parent=1 // loop_pre_header
      _
    $region3: #{overlap_patch_embed.1} parent=1 // loop_header
      %s14 = sphi 0, %s18
      %p15 = scmp.ge.s32.totalorder %s14, 4
      %s21 = sphi 0, %s33
      %s22 = sphi 0, %s29
      %s23 = sphi 0, %s21
      %s24 = sphi 0, %s22
      %s25 = sphi 0, %s23
      %s26 = sphi 0, %s24
      %s38 = sphi 0, %s40
      %s41 = sphi 0, %s38
      %s42 = sphi 0, %s41
      %s58 = sphi 0, %s42
      %s62 = sphi 0, %s62
      %s64 = sphi 0, %s62
      %s65 = sphi 0, %s64
      %s79 = sphi 0, %s65
      %s83 = sphi 0, %s83
      %s85 = sphi 0, %s83
      %s86 = sphi 0, %s85
      %s100 = sphi 0, %s86
      %s104 = sphi 0, %s104
      %s106 = sphi 0, %s104
      %s107 = sphi 0, %s106
      %s121 = sphi 0, %s107
      %s125 = sphi 0, %s125
      %s127 = sphi 0, %s125
      %s128 = sphi 0, %s127
      %s142 = sphi 0, %s128
      %s150 = sphi 0, %s152
      %s153 = sphi 0, %s150
      %s154 = sphi 0, %s153
      %s170 = sphi 0, %s154
    $region4: #{overlap_patch_embed.1} parent=1 // loop_header_branch
      %17 = sbr.rel (%p15) target = $region8
    $region5: #{overlap_patch_embed.1} parent=1 // loop_body
      %s19 = ssub.s32 %s14, 1
      %s20 = ssub.s32 %s14, 2
      %s27 = sadd.s32 1, %s22
      %p28 = scmp.ge.s32.totalorder %s27, 1
      %s29 = scalar_select %p28, 0, %s27
      %s30 = sadd.s32 1, %s21
      %s31 = scalar_select %p28, %s30, %s21
      %p32 = scmp.ge.s32.totalorder %s31, 2
      %s33 = scalar_select %p32, 0, %s31
      %s34 = ssub.s32 %s21, %s33
      %s35 = ssub.s32 %s22, %s29
      %s36 = sor.u32 %s34, %s35
      %p37 = scmp.eq.s32.totalorder %s36, 0
      %s39 = sadd.s32 %s38, 1
      %s40 = scalar_select %p37, %s38, %s39
      %p43 = pneg %p37
      %p44 = scmp.eq.s32.totalorder %s14, 1
      %p45 = por %p43, %p44
      %p46 = scmp.ne.s32.totalorder %s38, %s41
      %p47 = scmp.eq.s32.totalorder %s14, 0
      %p48 = por %p46, %p47
      %p49 = scmp.ne.s32.totalorder %s38, %s41
      %p50 = scmp.eq.s32.totalorder %s19, 1
      %p51 = por %p49, %p50
      %p52 = scmp.ne.s32.totalorder %s41, %s42
      %p53 = scmp.eq.s32.totalorder %s19, 0
      %p54 = por %p52, %p53
      %p55 = scmp.ne.s32.totalorder %s41, %s42
      %p56 = scmp.eq.s32.totalorder %s20, 1
      %p57 = por %p55, %p56
      %p59 = scmp.ne.s32.totalorder %s42, %s58
      %p60 = scmp.eq.s32.totalorder %s20, 0
      %p61 = por %p59, %p60
      %s63 = sadd.s32 %s62, 1
      %p66 = scmp.eq.s32.totalorder %s14, 1
      %p67 = scmp.ne.s32.totalorder %s62, %s64
      %p68 = scmp.eq.s32.totalorder %s14, 0
      %p69 = por %p67, %p68
      %p70 = scmp.ne.s32.totalorder %s62, %s64
      %p71 = scmp.eq.s32.totalorder %s19, 1
      %p72 = por %p70, %p71
      %p73 = scmp.ne.s32.totalorder %s64, %s65
      %p74 = scmp.eq.s32.totalorder %s19, 0
      %p75 = por %p73, %p74
      %p76 = scmp.ne.s32.totalorder %s64, %s65
      %p77 = scmp.eq.s32.totalorder %s20, 1
      %p78 = por %p76, %p77
      %p80 = scmp.ne.s32.totalorder %s65, %s79
      %p81 = scmp.eq.s32.totalorder %s20, 0
      %p82 = por %p80, %p81
      %s84 = sadd.s32 %s83, 1
      %p87 = scmp.eq.s32.totalorder %s14, 1
      %p88 = scmp.ne.s32.totalorder %s83, %s85
      %p89 = scmp.eq.s32.totalorder %s14, 0
      %p90 = por %p88, %p89
      %p91 = scmp.ne.s32.totalorder %s83, %s85
      %p92 = scmp.eq.s32.totalorder %s19, 1
      %p93 = por %p91, %p92
      %p94 = scmp.ne.s32.totalorder %s85, %s86
      %p95 = scmp.eq.s32.totalorder %s19, 0
      %p96 = por %p94, %p95
      %p97 = scmp.ne.s32.totalorder %s85, %s86
      %p98 = scmp.eq.s32.totalorder %s20, 1
      %p99 = por %p97, %p98
      %p101 = scmp.ne.s32.totalorder %s86, %s100
      %p102 = scmp.eq.s32.totalorder %s20, 0
      %p103 = por %p101, %p102
      %s105 = sadd.s32 %s104, 1
      %p108 = scmp.eq.s32.totalorder %s14, 1
      %p109 = scmp.ne.s32.totalorder %s104, %s106
      %p110 = scmp.eq.s32.totalorder %s14, 0
      %p111 = por %p109, %p110
      %p112 = scmp.ne.s32.totalorder %s104, %s106
      %p113 = scmp.eq.s32.totalorder %s19, 1
      %p114 = por %p112, %p113
      %p115 = scmp.ne.s32.totalorder %s106, %s107
      %p116 = scmp.eq.s32.totalorder %s19, 0
      %p117 = por %p115, %p116
      %p118 = scmp.ne.s32.totalorder %s106, %s107
      %p119 = scmp.eq.s32.totalorder %s20, 1
      %p120 = por %p118, %p119
      %p122 = scmp.ne.s32.totalorder %s107, %s121
      %p123 = scmp.eq.s32.totalorder %s20, 0
      %p124 = por %p122, %p123
      %s126 = sadd.s32 %s125, 1
      %p129 = scmp.eq.s32.totalorder %s14, 1
      %p130 = scmp.ne.s32.totalorder %s125, %s127
      %p131 = scmp.eq.s32.totalorder %s14, 0
      %p132 = por %p130, %p131
      %p133 = scmp.ne.s32.totalorder %s125, %s127
      %p134 = scmp.eq.s32.totalorder %s19, 1
      %p135 = por %p133, %p134
      %p136 = scmp.ne.s32.totalorder %s127, %s128
      %p137 = scmp.eq.s32.totalorder %s19, 0
      %p138 = por %p136, %p137
      %p139 = scmp.ne.s32.totalorder %s127, %s128
      %p140 = scmp.eq.s32.totalorder %s20, 1
      %p141 = por %p139, %p140
      %p143 = scmp.ne.s32.totalorder %s128, %s142
      %p144 = scmp.eq.s32.totalorder %s20, 0
      %p145 = por %p143, %p144
      %s146 = ssub.s32 %s21, %s33
      %s147 = ssub.s32 %s22, %s29
      %s148 = sor.u32 %s146, %s147
      %p149 = scmp.eq.s32.totalorder %s148, 0
      %s151 = sadd.s32 %s150, 1
      %s152 = scalar_select %p149, %s150, %s151
      %p155 = pneg %p149
      %p156 = scmp.eq.s32.totalorder %s14, 1
      %p157 = por %p155, %p156
      %p158 = scmp.ne.s32.totalorder %s150, %s153
      %p159 = scmp.eq.s32.totalorder %s14, 0
      %p160 = por %p158, %p159
      %p161 = scmp.ne.s32.totalorder %s150, %s153
      %p162 = scmp.eq.s32.totalorder %s19, 1
      %p163 = por %p161, %p162
      %p164 = scmp.ne.s32.totalorder %s153, %s154
      %p165 = scmp.eq.s32.totalorder %s19, 0
      %p166 = por %p164, %p165
      %p167 = scmp.ne.s32.totalorder %s153, %s154
      %p168 = scmp.eq.s32.totalorder %s20, 1
      %p169 = por %p167, %p168
      %p171 = scmp.ne.s32.totalorder %s154, %s170
      %p172 = scmp.eq.s32.totalorder %s20, 0
      %p173 = por %p171, %p172
      %p174 = scmp.le.s32.totalorder 1, %s14
      %p175 = scmp.lt.s32.totalorder %s14, 3
      %p176 = pnand %p174, %p175
      %p177 = pneg %p176
      // Predicated region
      $region9: #{overlap_patch_embed.1} parent=5 // pred_check
        _
      $region10: #{overlap_patch_embed.1} parent=5 // pred_check_branch
        %179 = sbr.rel (%p176) target = $region12
      $region11: #{overlap_patch_embed.1} parent=5 // pred_region
        %s180 = ssub.s32 %s14, 1
        // Predicated region
        $region13: #{overlap_patch_embed.1} parent=11 // pred_check
          %p181 = pneg %p75
        $region14: #{overlap_patch_embed.1} parent=11 // pred_check_branch
          %183 = sbr.rel (%p181) target = $region16
        $region15: #{overlap_patch_embed.1} parent=11 // pred_region
          _
        $region16: #{overlap_patch_embed.1} parent=11 // pred_fallthru
          _
        // Predicated region
        $region17: #{overlap_patch_embed.1} parent=11 // pred_check
          %p184 = pneg %p96
        $region18: #{overlap_patch_embed.1} parent=11 // pred_check_branch
          %186 = sbr.rel (%p184) target = $region20
        $region19: #{overlap_patch_embed.1} parent=11 // pred_region
          _
        $region20: #{overlap_patch_embed.1} parent=11 // pred_fallthru
          _
        // Predicated region
        $region21: #{overlap_patch_embed.1} parent=11 // pred_check
          %p187 = pneg %p117
        $region22: #{overlap_patch_embed.1} parent=11 // pred_check_branch
          %189 = sbr.rel (%p187) target = $region24
        $region23: #{overlap_patch_embed.1} parent=11 // pred_region
          _
        $region24: #{overlap_patch_embed.1} parent=11 // pred_fallthru
          _
        // Predicated region
        $region25: #{overlap_patch_embed.1} parent=11 // pred_check
          %p190 = pneg %p138
        $region26: #{overlap_patch_embed.1} parent=11 // pred_check_branch
          %192 = sbr.rel (%p190) target = $region28
        $region27: #{overlap_patch_embed.1} parent=11 // pred_region
          _
        $region28: #{overlap_patch_embed.1} parent=11 // pred_fallthru
          _
      $region12: #{overlap_patch_embed.1} parent=5 // pred_fallthru
        _
      %p193 = scmp.lt.s32.totalorder %s14, 2
      // Predicated region
      $region29: #{overlap_patch_embed.1} parent=5 // pred_check
        %p194 = pneg %p193
      $region30: #{overlap_patch_embed.1} parent=5 // pred_check_branch
        %196 = sbr.rel (%p194) target = $region32
      $region31: #{overlap_patch_embed.1} parent=5 // pred_region
        // Predicated region
        $region33: #{overlap_patch_embed.1} parent=31 // pred_check
          %p197 = pneg %p48
        $region34: #{overlap_patch_embed.1} parent=31 // pred_check_branch
          %199 = sbr.rel (%p197) target = $region36
        $region35: #{overlap_patch_embed.1} parent=31 // pred_region
          %s200 = smul.u32 2, %s22
          %p201 = scmp.lt.s32.totalorder %s21, 1
          %s202 = scalar_select %p201, %s21, 1
          %p203 = scmp.lt.s32.totalorder %s200, 1
          %s204 = scalar_select %p203, %s200, 1
          %s205 = smul.addr %s204, 2
          %s206 = smul.addr %s202, 4
          %s207 = sadd.s32 %s205, %s206
          %s208 = smul.addr %s207, 4
          %s209 = scalar_lea.vmem %s0, %s208
          %s210 = smul.u32 2, %s22
        $region36: #{overlap_patch_embed.1} parent=31 // pred_fallthru
          _
      $region32: #{overlap_patch_embed.1} parent=5 // pred_fallthru
        _
      %p211 = scmp.le.s32.totalorder 1, %s14
      %p212 = scmp.lt.s32.totalorder %s14, 3
      %p213 = pnand %p211, %p212
      %p214 = pneg %p213
      // Predicated region
      $region37: #{overlap_patch_embed.1} parent=5 // pred_check
        _
      $region38: #{overlap_patch_embed.1} parent=5 // pred_check_branch
        %216 = sbr.rel (%p213) target = $region40
      $region39: #{overlap_patch_embed.1} parent=5 // pred_region
        %s217 = ssub.s32 %s14, 1
        %s218 = smul.u32 2, %s24
        %p219 = scmp.lt.s32.totalorder %s23, 1
        %s220 = scalar_select %p219, %s23, 1
        %p221 = scmp.lt.s32.totalorder %s218, 1
        %s222 = scalar_select %p221, %s218, 1
        %s223 = smul.addr %s222, 2
        %s224 = smul.addr %s220, 4
        %s225 = sadd.s32 %s223, %s224
        %s226 = smul.addr %s225, 4
        %s227 = scalar_lea.vmem %s0, %s226
        %p228 = pneg %p54
        %p229 = pneg %p51
        %p230 = pneg %p75
        %p231 = pneg %p72
        %p232 = pneg %p96
        %p233 = pneg %p93
        %p234 = pneg %p117
        %p235 = pneg %p114
        %p236 = pneg %p138
        %p237 = pneg %p135
        %p238 = pneg %p166
        %p239 = pneg %p163
        %s240 = sand.u32 %s153, 1
        %s241 = scalar_lea.sflag [#allocation3], %s240
        %s242 = sand.u32 %s153, 1
        %s243 = smul.addr %s242, 16
        %s244 = scalar_lea.vmem [#allocation2], %s243
        %s245 = smul.u32 2, %s24
        %p246 = scmp.lt.s32.totalorder %s23, 1
        %s247 = scalar_select %p246, %s23, 1
        %p248 = scmp.lt.s32.totalorder %s245, 1
        %s249 = scalar_select %p248, %s245, 1
        %s250 = smul.addr %s249, 2
        %s251 = smul.addr %s247, 4
        %s252 = sadd.s32 %s250, %s251
        %s253 = smul.addr %s252, 4
        %s254 = scalar_lea.vmem %s0, %s253
        %s255 = smul.u32 2, %s24
        %s256 = smul.u32 2, %s24
        %v258 = vld [vmem:[%s254] sm:$0xff]
        %v259 = vld [vmem:[%s254 + $0x8] sm:$0xff]
        %v260 = vld [vmem:[%s1] sm:$0xf]
        %v261 = vld [vmem:[%s1 + $0x4] sm:$0xf]
        %v262 = vld [vmem:[%s1 + $0x8] sm:$0xf]
        %v263 = vld [vmem:[%s1 + $0xc] sm:$0xf]
        %v264 = vld [vmem:[%s1 + $0x10] sm:$0xf]
        %v265 = vld [vmem:[%s1 + $0x14] sm:$0xf]
        %v266 = vld [vmem:[%s1 + $0x18] sm:$0xf]
        %v267 = vld [vmem:[%s1 + $0x1c] sm:$0xf]
        %v268 = vld [vmem:[%s1 + $0x20] sm:$0xf]
        %v269 = vld [vmem:[%s1 + $0x24] sm:$0xf]
        %v270 = vld [vmem:[%s1 + $0x28] sm:$0xf]
        %v271 = vld [vmem:[%s1 + $0x2c] sm:$0xf]
        %v272 = vld [vmem:[%s1 + $0x30] sm:$0xf]
        %v273 = vld [vmem:[%s1 + $0x34] sm:$0xf]
        %v274 = vld [vmem:[%s1 + $0x38] sm:$0xf]
        %v275 = vld [vmem:[%s1 + $0x3c] sm:$0xf]
        %v276 = vld [vmem:[%s1 + $0x40] sm:$0xf]
        %v277 = vld [vmem:[%s1 + $0x44] sm:$0xf]
        %v278 = vld [vmem:[%s1 + $0x48] sm:$0x3]
        %v279 = vld [vmem:[%s2] sm:$0x1]
        %v281 = vlaneseq
        %v282 = vshrl.u32 %v281, 7
        %v283 = vsub.s32 0, %v282
        %v284 = vrot.slane %v279, %v283
        %v288 = vunpack.c.l.b16 %v258
        %v289 = vunpack.c.h.b16 %v258
        %v290 = vunpack.c.l.b16 %v259
        %v291 = vunpack.c.h.b16 %v259
        %v292 = vpack.c.b16 %v290, %v288
        %v293 = vpack.c.b16 %v291, %v289
        %v314 = vunpack.c.l.b16 %v260
        %v315 = vunpack.c.l.b16 %v261
        %v316 = vunpack.c.l.b16 %v262
        %v317 = vunpack.c.l.b16 %v263
        %v318 = vunpack.c.l.b16 %v264
        %v319 = vunpack.c.l.b16 %v265
        %v320 = vunpack.c.l.b16 %v266
        %v321 = vunpack.c.l.b16 %v267
        %v322 = vunpack.c.l.b16 %v268
        %v323 = vunpack.c.l.b16 %v269
        %v324 = vunpack.c.l.b16 %v270
        %v325 = vunpack.c.l.b16 %v271
        %v326 = vunpack.c.l.b16 %v272
        %v327 = vunpack.c.l.b16 %v273
        %v328 = vunpack.c.l.b16 %v274
        %v329 = vunpack.c.l.b16 %v275
        %v330 = vunpack.c.l.b16 %v276
        %v331 = vunpack.c.l.b16 %v277
        %v332 = vunpack.c.l.b16 %v278
        %v333 = vpack.c.b16 %v315, %v314
        %v334 = vpack.c.b16 %v317, %v316
        %v335 = vpack.c.b16 %v319, %v318
        %v336 = vpack.c.b16 %v321, %v320
        %v337 = vpack.c.b16 %v323, %v322
        %v338 = vpack.c.b16 %v325, %v324
        %v339 = vpack.c.b16 %v327, %v326
        %v340 = vpack.c.b16 %v329, %v328
        %v341 = vpack.c.b16 %v331, %v330
        %v342 = vpack.c.b16 %v332, %v332
        %vm352 = vcmask 154624
        %v354 = vsel %vm352, %v293, 0
        %vm356 = vcmask 1040384
        %vm357 = vcmask 1041408
        %v358 = vsel %vm356, 4294967295, 65535
        %v359 = vsel %vm357, %v358, 0
        %v361 = vand.u32 %v342, %v359
        %363 = vmatprep.subr.bf16.mxu0 0
        %364 = vmatpush1.bf16.msra.mxu0 %v333
        %365 = vmatprep.subr.bf16.mxu0 0
        %366 = vmatpush1.bf16.msra.mxu0 %v334
        %367 = vmatprep.subr.bf16.mxu0 0
        %368 = vmatpush1.bf16.msra.mxu0 %v335
        %369 = vmatprep.subr.bf16.mxu0 0
        %370 = vmatpush1.bf16.msra.mxu0 %v336
        %371 = vmatprep.subr.bf16.mxu0 0
        %372 = vmatpush1.bf16.msra.mxu0 %v337
        %373 = vmatprep.subr.bf16.mxu0 0
        %374 = vmatpush1.bf16.msra.mxu0 %v338
        %375 = vmatprep.subr.bf16.mxu0 0
        %376 = vmatpush1.bf16.msra.mxu0 %v339
        %377 = vmatprep.subr.bf16.mxu0 0
        %378 = vmatpush1.bf16.msra.mxu0 %v340
        %379 = vmatprep.subr.bf16.mxu0 0
        %380 = vmatpush1.bf16.msra.mxu0 %v341
        %381 = vmatprep.subr.bf16.mxu0 0
        %382 = vmatpush1.bf16.msra.mxu0 %v361
        %383 = vmatprep.subr.bf16.mxu0 0
        %384 = vmatpush1.bf16.msra.mxu0 0
        %385 = vmatprep.subr.bf16.mxu0 0
        %386 = vmatpush1.bf16.msra.mxu0 0
        %387 = vmatprep.subr.bf16.mxu0 0
        %388 = vmatpush1.bf16.msra.mxu0 0
        %389 = vmatprep.subr.bf16.mxu0 0
        %390 = vmatpush1.bf16.msra.mxu0 0
        %391 = vmatprep.subr.bf16.mxu0 0
        %392 = vmatpush1.bf16.msra.mxu0 0
        %393 = vmatprep.subr.bf16.mxu0 0
        %394 = vmatpush1.bf16.msra.mxu0 0
        %395 = vmatprep.mubr.bf16.mxu0 %v354
        %396 = vmatmul.mubr.bf16.gmra.mrb[0].mxu0 %v292
        %v397 = vpop.f32.mrb[0].mxu0
        %v398 = vadd.f32 %v284, %v397
        %v399 = vpop.f32.mrb[0].mxu0
        %v400 = vpop.f32.mrb[0].mxu0
        %v401 = vadd.f32 %v284, %v400
        %v402 = vpop.f32.mrb[0].mxu0
        %403 = vdwg.mxu0
        %vm404 = vcmask 261120
        %v405 = vsel %vm404, %v398, 0.0
        %406 = vadd.xlane.f32.xlu0 %v405
        %v407 = vpop.xlane.xlu0 %406
        %v408 = vsel %vm404, %v401, 0.0
        %409 = vadd.xlane.f32.xlu0 %v408
        %v410 = vpop.xlane.xlu0 %409
        %v411 = vrcp.pop 32.0
        %v412 = vmul.f32 %v407, %v411
        %v413 = vmul.f32 %v410, %v411
        %v414 = vsub.f32 %v398, %v412
        %v415 = vsub.f32 %v401, %v413
        %v416 = vmul.f32 %v414, %v414
        %v417 = vmul.f32 %v415, %v415
        %v418 = vsel %vm404, %v416, 0.0
        %419 = vadd.xlane.f32.xlu0 %v418
        %v420 = vpop.xlane.xlu0 %419
        %v421 = vsel %vm404, %v417, 0.0
        %422 = vadd.xlane.f32.xlu0 %v421
        %v423 = vpop.xlane.xlu0 %422
        %v424 = vmul.f32 %v420, %v411
        %v425 = vmul.f32 %v423, %v411
        %v426 = vadd.f32 %v424, 1e-05
        %v427 = vadd.f32 %v425, 1e-05
        %v428 = vrsqrt.pop %v426
        %v429 = vrsqrt.pop %v427
        %v430 = vmul.f32 %v414, %v428
        %v431 = vmul.f32 %v415, %v429
        %v432 = vld [vmem:[%s3] sm:$0x1]
        %v434 = vlaneseq
        %v435 = vshrl.u32 %v434, 7
        %v436 = vsub.s32 0, %v435
        %v437 = vrot.slane %v432, %v436
        %v439 = vmul.f32 %v430, %v437
        %v440 = vmul.f32 %v431, %v437
        %v441 = vld [vmem:[%s4] sm:$0x1]
        %v443 = vlaneseq
        %v444 = vshrl.u32 %v443, 7
        %v445 = vsub.s32 0, %v444
        %v446 = vrot.slane %v441, %v445
        %v448 = vadd.f32 %v439, %v446
        %v449 = vadd.f32 %v440, %v446
        %450 = vst.msk [vmem:[%s244] sm:$0xff] %vm404, %v448
        %451 = vst.msk [vmem:[%s244 + $0x8] sm:$0xff] %vm404, %v449
        %s452 = sand.u32 %s153, 1
        %s453 = scalar_lea.sflag [#allocation3], %s452
        %s454 = sand.u32 %s153, 1
        %s455 = smul.addr %s454, 16
        %s456 = scalar_lea.vmem [#allocation2], %s455
        // Predicated region
        $region41: #{overlap_patch_embed.1} parent=39 // pred_check
          %p457 = pneg %p163
        $region42: #{overlap_patch_embed.1} parent=39 // pred_check_branch
          %459 = sbr.rel (%p457) target = $region44
        $region43: #{overlap_patch_embed.1} parent=39 // pred_region
          %s460 = smul.u32 2, %s24
          %s462 = ssub.s32 256, 256
          %463 = vsyncadd %s453, %s462
          %s464 = smul.addr %s23, 2
          %s465 = sadd.s32 %s460, %s464
          %s466 = smul.addr %s465, 128
          %s467 = scalar_lea.hbm %s5, %s466
          %s468 = sshll.u32 %s456, 4
          %s469 = int_to_ptr.vmem [resolvable:$true] %s468
          %474 = dma.vmem_to_hbm [thread:$0]  %s469, 256, %s467, %s453, 128, 128, 8
        $region44: #{overlap_patch_embed.1} parent=39 // pred_fallthru
          _
      $region40: #{overlap_patch_embed.1} parent=5 // pred_fallthru
        _
      %p475 = scmp.le.s32.totalorder 2, %s14
      // Predicated region
      $region45: #{overlap_patch_embed.1} parent=5 // pred_check
        %p476 = pneg %p475
      $region46: #{overlap_patch_embed.1} parent=5 // pred_check_branch
        %478 = sbr.rel (%p476) target = $region48
      $region47: #{overlap_patch_embed.1} parent=5 // pred_region
        %s479 = ssub.s32 %s14, 2
        // Predicated region
        $region49: #{overlap_patch_embed.1} parent=47 // pred_check
          %p480 = pneg %p169
        $region50: #{overlap_patch_embed.1} parent=47 // pred_check_branch
          %482 = sbr.rel (%p480) target = $region52
        $region51: #{overlap_patch_embed.1} parent=47 // pred_region
          %s483 = sand.u32 %s154, 1
          %s484 = scalar_lea.sflag [#allocation3], %s483
          %s485 = sand.u32 %s154, 1
          %s486 = smul.addr %s485, 16
          %s487 = scalar_lea.vmem [#allocation2], %s486
          %488 = dma.done %s484, 256
        $region52: #{overlap_patch_embed.1} parent=47 // pred_fallthru
          _
      $region48: #{overlap_patch_embed.1} parent=5 // pred_fallthru
        _
    $region6: #{overlap_patch_embed.1} parent=1 // loop_footer
      %s18 = sadd.s32 1, %s14
    $region7: #{overlap_patch_embed.1} parent=1 // loop_footer_branch
      %13 = sbr.rel target = $region3
    $region8: #{overlap_patch_embed.1} parent=1 // loop_exit
      _
    %489 = vsyncpa [#allocation3], 1
    %s490 = scalar_lea.sflag [#allocation3], 1
    %491 = vsyncpa %s490, 1

</llo_original>
